<compile_context>
chip_gen: v7x
topology: tpu7x:2x2x1
jax: 0.10.0
libtpu: 0.0.40
codegen_flags: <defaults>
</compile_context>

<pallas_src>
import functools

import jax
import jax.numpy as jnp
from jax.experimental import pallas as pl
from jax.experimental.pallas import tpu as pltpu

HIDDEN = 30          # in_features  (hidden_state_size)
OUT = 27             # out_features
OUT_PAD = 128        # lane-dense padded width used only for the in-kernel compute
NEG_BIG = -1e30      # finite large-negative bias for padded lanes -> exp underflows to 0


def linear_softmax_kernel(x_ref, w_ref, b_ref, o_ref):
    # MXU matmul with f32 accumulation: (tb, 30) @ (30, 128) -> (tb, 128).
    logits = jnp.dot(x_ref[...], w_ref[...], preferred_element_type=jnp.float32)
    logits = logits + b_ref[...]                     # (tb, 128) + (1, 128)
    # Numerically-stable softmax over the 128-wide slab; padded lanes carry a
    # -1e30 bias, so their exp() is exactly 0 and they do not affect max/sum.
    m = jnp.max(logits, axis=-1, keepdims=True)
    e = jnp.exp(logits - m)
    s = jnp.sum(e, axis=-1, keepdims=True)
    p = e / s                                        # exact: rows sum to 1 in f32
    # Store only the 27 real output lanes (true-width output block).
    o_ref[...] = p[:, :OUT].astype(o_ref.dtype)


def pad_params(w, b):
    """One-time padding of weights/bias to a lane-dense 128-wide compute layout."""
    w_pad = jnp.zeros((HIDDEN, OUT_PAD), w.dtype).at[:, :OUT].set(w)
    b_pad = (jnp.full((1, OUT_PAD), NEG_BIG, jnp.float32)
             .at[:, :OUT].set(b.astype(jnp.float32)))
    return w_pad, b_pad


def _round8(n):
    return max(8, ((n + 7) // 8) * 8)


@functools.partial(jax.jit, static_argnames=("tile_b",))
def linear_softmax(x, w_pad, b_pad, *, tile_b=4096):
    """x: (B, 30) f32; w_pad: (30, 128); b_pad: (1, 128). Returns (B, 27) softmax."""
    B = x.shape[0]

    # Batch tile: multiple of 8 (f32 sublanes), capped at tile_b.
    tb = min(tile_b, _round8(B))
    # Prefer >= 2 grid steps so v7x's two TensorCores both get work; the extra
    # ~0.35 us step is noise and this is harmless on v5e/v6e (1 TC).
    if B >= 16 and pl.cdiv(B, tb) < 2:
        tb = _round8(pl.cdiv(B, 2))
    n_tiles = pl.cdiv(B, tb)   # partial last block handled by Pallas (no jnp.pad)

    cost = pl.CostEstimate(
        flops=2 * B * HIDDEN * OUT,
        transcendentals=B * OUT,
        bytes_accessed=B * (HIDDEN + OUT) * 4 + (HIDDEN * OUT_PAD + OUT_PAD) * 4,
    )

    return pl.pallas_call(
        linear_softmax_kernel,
        out_shape=jax.ShapeDtypeStruct((B, OUT), x.dtype),
        grid_spec=pltpu.PrefetchScalarGridSpec(
            num_scalar_prefetch=0,
            grid=(n_tiles,),
            in_specs=[
                pl.BlockSpec((tb, HIDDEN), lambda i: (i, 0)),       # x tile
                pl.BlockSpec((HIDDEN, OUT_PAD), lambda i: (0, 0)),  # W (resident)
                pl.BlockSpec((1, OUT_PAD), lambda i: (0, 0)),       # bias (resident)
            ],
            out_specs=pl.BlockSpec((tb, OUT), lambda i: (i, 0)),    # true-width out
        ),
        compiler_params=pltpu.CompilerParams(
            dimension_semantics=("parallel",),  # shard batch tiles across TCs on v7x
        ),
        cost_estimate=cost,
    )(x, w_pad, b_pad)


# TODO(synk): at tiny B (e.g. B=8) this layer is pure launch/DMA overhead; in a
# real model it should be fused into the surrounding kernel rather than called
# standalone.


if __name__ == "__main__":
    key = jax.random.PRNGKey(0)
    kx, kw, kb = jax.random.split(key, 3)

    # Deterministic "PyTorch-like" init: uniform(-1/sqrt(fan_in), 1/sqrt(fan_in))
    bound = 1.0 / jnp.sqrt(jnp.float32(HIDDEN))
    w = jax.random.uniform(kw, (HIDDEN, OUT), jnp.float32, -bound, bound)
    b = jax.random.uniform(kb, (OUT,), jnp.float32, -bound, bound)
    w_pad, b_pad = pad_params(w, b)

    # Small batch (matches the module's forward on hidden-state rows).
    B = 8
    x = jax.random.normal(kx, (B, HIDDEN), jnp.float32)

    out = jax.block_until_ready(linear_softmax(x, w_pad, b_pad))
    ref = jax.nn.softmax(x @ w + b, axis=-1)
    assert out.shape == (B, OUT)
    assert jnp.allclose(out, ref, atol=1e-5, rtol=1e-4)
    assert jnp.allclose(jnp.sum(out, axis=-1), 1.0, atol=1e-5)

    # Exercise the multi-tile + ragged (partial last block) path as well.
    B2 = 300
    x2 = jax.random.normal(jax.random.PRNGKey(1), (B2, HIDDEN), jnp.float32)
    out2 = jax.block_until_ready(linear_softmax(x2, w_pad, b_pad, tile_b=128))
    ref2 = jax.nn.softmax(x2 @ w + b, axis=-1)
    assert out2.shape == (B2, OUT)
    assert jnp.allclose(out2, ref2, atol=1e-5, rtol=1e-4)
    assert jnp.allclose(jnp.sum(out2, axis=-1), 1.0, atol=1e-5)

    print("KERNEL_OK")
</pallas_src>

<mosaic_0001>
module attributes {stable_mosaic.version = 11 : i64} {
  func.func @linear_softmax_kernel(%arg0: i32, %arg1: memref<8x30xf32, #tpu.memory_space<vmem>>, %arg2: memref<30x128xf32, #tpu.memory_space<vmem>>, %arg3: memref<1x128xf32, #tpu.memory_space<vmem>>, %arg4: memref<8x27xf32, #tpu.memory_space<vmem>>) attributes {dimension_semantics = [#tpu.dimension_semantics<parallel>], iteration_bounds = array<i64: 1>, scalar_prefetch = 0 : i64, scratch_operands = 0 : i64, tpu.core_type = #tpu.core_type<tc>, window_params = [{transform_indices = @transform_0, window_bounds = array<i64: 8, 30>}, {pipeline_mode = #tpu.pipeline_mode<synchronous>, transform_indices = @transform_1, window_bounds = array<i64: 30, 128>}, {pipeline_mode = #tpu.pipeline_mode<synchronous>, transform_indices = @transform_2, window_bounds = array<i64: 1, 128>}, {transform_indices = @transform_3, window_bounds = array<i64: 8, 27>}]} {
    %c0 = arith.constant 0 : index
    %c0_0 = arith.constant 0 : index
    %0 = vector.load %arg1[%c0, %c0_0] : memref<8x30xf32, #tpu.memory_space<vmem>>, vector<8x30xf32>
    %c0_1 = arith.constant 0 : index
    %c0_2 = arith.constant 0 : index
    %1 = vector.load %arg2[%c0_1, %c0_2] : memref<30x128xf32, #tpu.memory_space<vmem>>, vector<30x128xf32>
    %cst = arith.constant dense<0.000000e+00> : vector<8x128xf32>
    %2 = tpu.matmul %0, %1, %cst {dimension_numbers = #tpu.dot_dimension_numbers<[1], [0], [0], [1], [0, 0, 1, 1], [], []>} : vector<8x30xf32>, vector<30x128xf32>, vector<8x128xf32> -> vector<8x128xf32>
    %c0_3 = arith.constant 0 : index
    %c0_4 = arith.constant 0 : index
    %3 = vector.load %arg3[%c0_3, %c0_4] : memref<1x128xf32, #tpu.memory_space<vmem>>, vector<1x128xf32>
    %4 = vector.broadcast %3 : vector<1x128xf32> to vector<8x128xf32>
    %5 = arith.addf %2, %4 : vector<8x128xf32>
    %cst_5 = arith.constant dense<0xFF800000> : vector<8xf32>
    %6 = vector.multi_reduction <maximumf>, %5, %cst_5 [1] : vector<8x128xf32> to vector<8xf32>
    %7 = vector.shape_cast %6 : vector<8xf32> to vector<8x1xf32>
    %8 = vector.broadcast %7 : vector<8x1xf32> to vector<8x128xf32>
    %9 = arith.subf %5, %8 : vector<8x128xf32>
    %10 = math.exp %9 : vector<8x128xf32>
    %cst_6 = arith.constant dense<0.000000e+00> : vector<8xf32>
    %11 = vector.multi_reduction <add>, %10, %cst_6 [1] : vector<8x128xf32> to vector<8xf32>
    %12 = vector.shape_cast %11 : vector<8xf32> to vector<8x1xf32>
    %13 = vector.broadcast %12 : vector<8x1xf32> to vector<8x128xf32>
    %14 = arith.divf %10, %13 : vector<8x128xf32>
    %15 = vector.extract_strided_slice %14 {offsets = [0, 0], sizes = [8, 27], strides = [1, 1]} : vector<8x128xf32> to vector<8x27xf32>
    %c0_7 = arith.constant 0 : index
    %c0_8 = arith.constant 0 : index
    %16 = vector.load %arg4[%c0_7, %c0_8] : memref<8x27xf32, #tpu.memory_space<vmem>>, vector<8x27xf32>
    tpu.vector_store %arg4[%c0_7, %c0_8], %15 {strides = array<i32>} : memref<8x27xf32, #tpu.memory_space<vmem>>, vector<8x27xf32>,
    return
  }
  func.func @transform_0(%arg0: i32) -> (i32, i32) {
    %c0_i32 = arith.constant 0 : i32
    %c0_i32_0 = arith.constant 0 : i32
    return %arg0, %c0_i32 : i32, i32
  }
  func.func @transform_1(%arg0: i32) -> (i32, i32) {
    %c0_i32 = arith.constant 0 : i32
    %c0_i32_0 = arith.constant 0 : i32
    %c0_i32_1 = arith.constant 0 : i32
    return %c0_i32, %c0_i32_0 : i32, i32
  }
  func.func @transform_2(%arg0: i32) -> (i32, i32) {
    %c0_i32 = arith.constant 0 : i32
    %c0_i32_0 = arith.constant 0 : i32
    %c0_i32_1 = arith.constant 0 : i32
    return %c0_i32, %c0_i32_0 : i32, i32
  }
  func.func @transform_3(%arg0: i32) -> (i32, i32) {
    %c0_i32 = arith.constant 0 : i32
    %c0_i32_0 = arith.constant 0 : i32
    return %arg0, %c0_i32 : i32, i32
  }
}

</mosaic_0001>

<llo_original>
// kernel: linear_softmax.1
$region0: #{linear_softmax.1}
  #allocation0 [shape = 'u32[]', space=smem, size = 0x4, offset = 0x4, fixed_abs, tag = 'smem constant byte address 0x4 - core index']
  #allocation1 [shape = 'u32[144,128]{1,0:T(1,128)}', space=vmem, size = 0x12000, scoped, tag = 'internal scratch']
  %s0 = inlined_call_operand.hbm [shape: f32[8,30], index: 0, kind: input, shape index: {}]
  %s1 = inlined_call_operand.hbm [shape: f32[30,128], index: 1, kind: input, shape index: {}]
  %s2 = inlined_call_operand.vmem [shape: f32[1,128], index: 2, kind: input, shape index: {}]
  %s3 = inlined_call_operand.hbm [shape: f32[8,27], index: 3, kind: output, shape index: {}]
  %s4 = sld [smem:[#allocation0]]
  $region30: #{linear_softmax.1} parent=0
    _
  %s6 = ssub.s32 1, %s4
  %s7 = scalar_select 0, %s6, %s4
  $region1: #{linear_softmax.1} parent=0
    #allocation2 [shape = 'u8[4096]{0}', space=vmem, size = 0x1000, scoped, tag = 'input window, operand 0, single buffered']
    #allocation3 [shape = 's32[1]{0}', space=sflag, size = 0x4, scoped, tag = 'scoped memory for linear_softmax.1']
    #allocation4 [shape = 's32[1]{0}', space=sflag, size = 0x4, scoped, tag = 'scoped memory for linear_softmax.1']
    #allocation5 [shape = 'u8[16384]{0}', space=vmem, size = 0x4000, scoped, tag = 'input window, operand 1, single buffered']
    #allocation6 [shape = 's32[1]{0}', space=sflag, size = 0x4, scoped, tag = 'scoped memory for linear_softmax.1']
    #allocation7 [shape = 'u8[4096]{0}', space=vmem, size = 0x1000, scoped, tag = 'output window, operand 0, single buffered']
    %8 = vsyncpa [#allocation3], 0
    %9 = vsyncpa [#allocation6], 0
    %10 = vsyncpa [#allocation4], 0
    // Predicated region
    $region2: #{linear_softmax.1} parent=1 // pred_check
      _
    $region3: #{linear_softmax.1} parent=1 // pred_check_branch
      %12 = sbr.rel (0) target = $region5
    $region4: #{linear_softmax.1} parent=1 // pred_region
      %s14 = ssub.s32 128, 128
      %15 = vsyncadd [#allocation3], %s14
      %s17 = sshll.u32 [#allocation2], 4
      %s18 = int_to_ptr.vmem [resolvable:$true] %s17
      %20 = dma.hbm_to_vmem [thread:$0]  %s0, 128, %s18, [#allocation3]
    $region5: #{linear_softmax.1} parent=1 // pred_fallthru
      _
    // Predicated region
    $region6: #{linear_softmax.1} parent=1 // pred_check
      _
    $region7: #{linear_softmax.1} parent=1 // pred_check_branch
      %22 = sbr.rel (0) target = $region9
    $region8: #{linear_softmax.1} parent=1 // pred_region
      %s24 = ssub.s32 512, 512
      %25 = vsyncadd [#allocation6], %s24
      %s26 = sshll.u32 [#allocation5], 4
      %s27 = int_to_ptr.vmem [resolvable:$true] %s26
      %32 = dma.hbm_to_vmem [thread:$0]  %s1, 512, %s27, [#allocation6], 128, 128, 8
    $region9: #{linear_softmax.1} parent=1 // pred_fallthru
      _
    // Predicated region
    $region10: #{linear_softmax.1} parent=1 // pred_check
      _
    $region11: #{linear_softmax.1} parent=1 // pred_check_branch
      %34 = sbr.rel (0) target = $region13
    $region12: #{linear_softmax.1} parent=1 // pred_region
      _
    $region13: #{linear_softmax.1} parent=1 // pred_fallthru
      _
    // Predicated region
    $region14: #{linear_softmax.1} parent=1 // pred_check
      _
    $region15: #{linear_softmax.1} parent=1 // pred_check_branch
      %36 = sbr.rel (0) target = $region17
    $region16: #{linear_softmax.1} parent=1 // pred_region
      %37 = dma.done [#allocation3], 128
    $region17: #{linear_softmax.1} parent=1 // pred_fallthru
      _
    // Predicated region
    $region18: #{linear_softmax.1} parent=1 // pred_check
      _
    $region19: #{linear_softmax.1} parent=1 // pred_check_branch
      %39 = sbr.rel (0) target = $region21
    $region20: #{linear_softmax.1} parent=1 // pred_region
      %40 = dma.done [#allocation6], 512
    $region21: #{linear_softmax.1} parent=1 // pred_fallthru
      _
    %v41 = vld [vmem:[#allocation2] sm:$0xff]
    %v42 = vld [vmem:[#allocation5] sm:$0xff]
    %v43 = vld [vmem:[#allocation5 + $0x8] sm:$0xff]
    %v44 = vld [vmem:[#allocation5 + $0x10] sm:$0xff]
    %v45 = vld [vmem:[#allocation5 + $0x18] sm:$0x3f]
    %v46 = vld [vmem:[%s2] sm:$0x1]
    %v48 = vlaneseq
    %v49 = vshrl.u32 %v48, 7
    %v50 = vsub.s32 0, %v49
    %v51 = vrot.slane %v46, %v50
    %vm53 = vcmask 244736
    %v55 = vsel %vm53, %v41, 0
    %vm57 = vcmask 1045504
    %v59 = vsel %vm57, %v45, 0
    %61 = vmatprep.subr.mxu0 0.0
    %62 = vmatpush1.msra.mxu0 %v42
    %63 = vmatprep.subr.mxu0 0.0
    %64 = vmatpush1.msra.mxu0 %v43
    %65 = vmatprep.subr.mxu0 0.0
    %66 = vmatpush1.msra.mxu0 %v44
    %67 = vmatprep.subr.mxu0 0.0
    %68 = vmatpush1.msra.mxu0 %v59
    %69 = vmatprep.subr.mxu0 0.0
    %70 = vmatpush1.msra.mxu0 0.0
    %71 = vmatprep.subr.mxu0 0.0
    %72 = vmatpush1.msra.mxu0 0.0
    %73 = vmatprep.subr.mxu0 0.0
    %74 = vmatpush1.msra.mxu0 0.0
    %75 = vmatprep.subr.mxu0 0.0
    %76 = vmatpush1.msra.mxu0 0.0
    %77 = vmatprep.subr.mxu0 0.0
    %78 = vmatpush1.msra.mxu0 0.0
    %79 = vmatprep.subr.mxu0 0.0
    %80 = vmatpush1.msra.mxu0 0.0
    %81 = vmatprep.subr.mxu0 0.0
    %82 = vmatpush1.msra.mxu0 0.0
    %83 = vmatprep.subr.mxu0 0.0
    %84 = vmatpush1.msra.mxu0 0.0
    %85 = vmatprep.subr.mxu0 0.0
    %86 = vmatpush1.msra.mxu0 0.0
    %87 = vmatprep.subr.mxu0 0.0
    %88 = vmatpush1.msra.mxu0 0.0
    %89 = vmatprep.subr.mxu0 0.0
    %90 = vmatpush1.msra.mxu0 0.0
    %91 = vmatprep.subr.mxu0 0.0
    %92 = vmatpush1.msra.mxu0 0.0
    %93 = vmatprep.subr.mxu0 0.0
    %94 = vmatpush1.msra.mxu0 0.0
    %95 = vmatprep.subr.mxu0 0.0
    %96 = vmatpush1.msra.mxu0 0.0
    %97 = vmatprep.subr.mxu0 0.0
    %98 = vmatpush1.msra.mxu0 0.0
    %99 = vmatprep.subr.mxu0 0.0
    %100 = vmatpush1.msra.mxu0 0.0
    %101 = vmatprep.subr.mxu0 0.0
    %102 = vmatpush1.msra.mxu0 0.0
    %103 = vmatprep.subr.mxu0 0.0
    %104 = vmatpush1.msra.mxu0 0.0
    %105 = vmatprep.subr.mxu0 0.0
    %106 = vmatpush1.msra.mxu0 0.0
    %107 = vmatprep.subr.mxu0 0.0
    %108 = vmatpush1.msra.mxu0 0.0
    %109 = vmatprep.subr.mxu0 0.0
    %110 = vmatpush1.msra.mxu0 0.0
    %111 = vmatprep.subr.mxu0 0.0
    %112 = vmatpush1.msra.mxu0 0.0
    %113 = vmatprep.subr.mxu0 0.0
    %114 = vmatpush1.msra.mxu0 0.0
    %115 = vmatprep.subr.mxu0 0.0
    %116 = vmatpush1.msra.mxu0 0.0
    %117 = vmatprep.subr.mxu0 0.0
    %118 = vmatpush1.msra.mxu0 0.0
    %119 = vmatprep.subr.mxu0 0.0
    %120 = vmatpush1.msra.mxu0 0.0
    %121 = vmatprep.subr.mxu0 0.0
    %122 = vmatpush1.msra.mxu0 0.0
    %123 = vmatprep.subr.mxu0 0.0
    %124 = vmatpush1.msra.mxu0 0.0
    %125 = vmatprep.mubr.f32.mxu0 0.0
    %126 = vmatmul.mubr.f32.gmra.mrb[0].mxu0 %v55
    %v127 = vpop.f32.mrb[0].mxu0
    %v128 = vadd.f32 %v51, %v127
    %v129 = vpop.f32.mrb[0].mxu0
    %130 = vdwg.mxu0
    %131 = vmax.xlane.f32.xlu0 %v128
    %v132 = vpop.xlane.xlu0 %131
    %v133 = vsub.f32 %v128, %v132
    %v134 = vmul.f32 %v133, 1.442695
    %v135 = vpow.pop %v134
    %136 = vadd.xlane.f32.xlu0 %v135
    %v137 = vpop.xlane.xlu0 %136
    %v138 = vrcp.pop %v137
    %v139 = vmul.f32 %v135, %v138
    %vm140 = vcmask 220160
    %141 = vst.msk [vmem:[#allocation7] sm:$0xff] %vm140, %v139
    // Predicated region
    $region22: #{linear_softmax.1} parent=1 // pred_check
      _
    $region23: #{linear_softmax.1} parent=1 // pred_check_branch
      %143 = sbr.rel (0) target = $region25
    $region24: #{linear_softmax.1} parent=1 // pred_region
      %s145 = ssub.s32 128, 128
      %146 = vsyncadd [#allocation4], %s145
      %s148 = sshll.u32 [#allocation7], 4
      %s149 = int_to_ptr.vmem [resolvable:$true] %s148
      %151 = dma.vmem_to_hbm [thread:$0]  %s149, 128, %s3, [#allocation4]
    $region25: #{linear_softmax.1} parent=1 // pred_fallthru
      _
    // Predicated region
    $region26: #{linear_softmax.1} parent=1 // pred_check
      _
    $region27: #{linear_softmax.1} parent=1 // pred_check_branch
      %153 = sbr.rel (0) target = $region29
    $region28: #{linear_softmax.1} parent=1 // pred_region
      %154 = dma.done [#allocation4], 128
    $region29: #{linear_softmax.1} parent=1 // pred_fallthru
      _
    %155 = vsyncpa [#allocation3], 1
    %156 = vsyncpa [#allocation6], 1
    %157 = vsyncpa [#allocation4], 1

</llo_original>
